<compile_context>
chip_gen: v5e
topology: v5e:2x2
jax: 0.10.0
libtpu: 0.0.40
codegen_flags: <defaults>
</compile_context>

<pallas_src>
import jax
import jax.numpy as jnp
from jax.experimental import pallas as pl
from jax.experimental.pallas import tpu as pltpu

EPS = 1e-5


def bn_add_relu_kernel(x_ref, res_ref, gamma_ref, beta_ref, o_ref):
    # x_ref, res_ref, o_ref: (NHW, C_tile); gamma_ref, beta_ref: (1, C_tile)
    x = x_ref[...]                                   # f32 already, no cast
    nhw = x.shape[0]
    inv_n = jnp.float32(1.0 / nhw)

    # One-pass per-channel batch statistics (biased variance, train-mode BN).
    s1 = jnp.sum(x, axis=0, keepdims=True)           # (1, C_tile)
    s2 = jnp.sum(x * x, axis=0, keepdims=True)       # (1, C_tile)
    mean = s1 * inv_n
    var = s2 * inv_n - mean * mean
    inv_std = jax.lax.rsqrt(var + EPS)

    # Fold normalization + affine into a single scale/shift.
    scale = gamma_ref[...] * inv_std                 # (1, C_tile)
    shift = beta_ref[...] - mean * scale             # (1, C_tile)

    # One fused elementwise pass: normalize + affine + residual add + ReLU.
    y = x * scale + shift + res_ref[...]
    o_ref[...] = jnp.maximum(y, 0.0).astype(o_ref.dtype)


def batchnorm_add_relu(x, residual, gamma, beta, *, num_channel_tiles=2):
    """x, residual: (N, C, H, W) float32. gamma, beta: (C,)."""
    N, C, H, W = x.shape
    nhw = N * H * W

    # NCHW -> lane-dense (NHW, C).
    # TODO(synk): in a real pipeline carry NHWC end-to-end to drop these
    # wrapper transposes (extra HBM round-trips at larger batch sizes).
    x2 = jnp.transpose(x, (0, 2, 3, 1)).reshape(nhw, C)
    r2 = jnp.transpose(residual, (0, 2, 3, 1)).reshape(nhw, C)

    # Pad channels so each grid step gets a 128-aligned lane-dense tile.
    lane = 128
    tile_c = pl.cdiv(pl.cdiv(C, num_channel_tiles), lane) * lane
    c_pad = tile_c * num_channel_tiles
    if c_pad != C:
        pad = c_pad - C
        x2 = jnp.pad(x2, ((0, 0), (0, pad)))
        r2 = jnp.pad(r2, ((0, 0), (0, pad)))
        gamma = jnp.pad(gamma, (0, pad), constant_values=1.0)
        beta = jnp.pad(beta, (0, pad))
    g2 = gamma.reshape(1, c_pad).astype(jnp.float32)
    b2 = beta.reshape(1, c_pad).astype(jnp.float32)

    out2 = pl.pallas_call(
        bn_add_relu_kernel,
        out_shape=jax.ShapeDtypeStruct((nhw, c_pad), x.dtype),
        grid=(num_channel_tiles,),
        in_specs=[
            pl.BlockSpec((nhw, tile_c), lambda i: (0, i)),
            pl.BlockSpec((nhw, tile_c), lambda i: (0, i)),
            pl.BlockSpec((1, tile_c), lambda i: (0, i)),
            pl.BlockSpec((1, tile_c), lambda i: (0, i)),
        ],
        out_specs=pl.BlockSpec((nhw, tile_c), lambda i: (0, i)),
        compiler_params=pltpu.CompilerParams(
            dimension_semantics=("parallel",),
        ),
    )(x2, r2, g2, b2)

    # Drop channel padding, (NHW, C) -> NCHW.
    out2 = out2[:, :C]
    return jnp.transpose(out2.reshape(N, H, W, C), (0, 3, 1, 2))


def reference(x, residual, gamma, beta):
    mean = jnp.mean(x, axis=(0, 2, 3), keepdims=True)
    var = jnp.mean((x - mean) ** 2, axis=(0, 2, 3), keepdims=True)
    xn = (x - mean) * jax.lax.rsqrt(var + EPS)
    y = xn * gamma.reshape(1, -1, 1, 1) + beta.reshape(1, -1, 1, 1)
    return jnp.maximum(y + residual, 0.0)


if __name__ == "__main__":
    # Shapes implied by the module: BatchNorm2d(2016) on [1, 2016, 7, 7].
    N, C, H, W = 1, 2016, 7, 7

    key = jax.random.PRNGKey(0)
    k1, k2 = jax.random.split(key)
    x266 = jax.random.normal(k1, (N, C, H, W), dtype=jnp.float32)
    x281 = jax.random.normal(k2, (N, C, H, W), dtype=jnp.float32)

    # PyTorch BatchNorm2d default init: weight=1, bias=0.
    gamma = jnp.ones((C,), dtype=jnp.float32)
    beta = jnp.zeros((C,), dtype=jnp.float32)

    out = batchnorm_add_relu(x266, x281, gamma, beta)
    out = jax.block_until_ready(out)

    ref = reference(x266, x281, gamma, beta)
    assert out.shape == (N, C, H, W)
    assert jnp.max(jnp.abs(out - ref)) < 1e-4, "mismatch vs. reference"

    print("KERNEL_OK")
</pallas_src>

<mosaic_0001>
module attributes {stable_mosaic.version = 11 : i64} {
  func.func @bn_add_relu_kernel(%arg0: i32, %arg1: memref<49x1024xf32, #tpu.memory_space<vmem>>, %arg2: memref<49x1024xf32, #tpu.memory_space<vmem>>, %arg3: memref<1x1024xf32, #tpu.memory_space<vmem>>, %arg4: memref<1x1024xf32, #tpu.memory_space<vmem>>, %arg5: memref<49x1024xf32, #tpu.memory_space<vmem>>) attributes {dimension_semantics = [#tpu.dimension_semantics<parallel>], iteration_bounds = array<i64: 2>, scalar_prefetch = 0 : i64, scratch_operands = 0 : i64, tpu.core_type = #tpu.core_type<tc>, window_params = [{transform_indices = @transform_0, window_bounds = array<i64: 49, 1024>}, {transform_indices = @transform_1, window_bounds = array<i64: 49, 1024>}, {transform_indices = @transform_2, window_bounds = array<i64: 1, 1024>}, {transform_indices = @transform_3, window_bounds = array<i64: 1, 1024>}, {transform_indices = @transform_4, window_bounds = array<i64: 49, 1024>}]} {
    %c0 = arith.constant 0 : index
    %c0_0 = arith.constant 0 : index
    %0 = vector.load %arg1[%c0, %c0_0] : memref<49x1024xf32, #tpu.memory_space<vmem>>, vector<49x1024xf32>
    %cst = arith.constant dense<0.000000e+00> : vector<1024xf32>
    %1 = vector.multi_reduction <add>, %0, %cst [0] : vector<49x1024xf32> to vector<1024xf32>
    %2 = vector.shape_cast %1 : vector<1024xf32> to vector<1x1024xf32>
    %3 = arith.mulf %0, %0 : vector<49x1024xf32>
    %cst_1 = arith.constant dense<0.000000e+00> : vector<1024xf32>
    %4 = vector.multi_reduction <add>, %3, %cst_1 [0] : vector<49x1024xf32> to vector<1024xf32>
    %5 = vector.shape_cast %4 : vector<1024xf32> to vector<1x1024xf32>
    %cst_2 = arith.constant 0.0204081628 : f32
    %6 = vector.broadcast %cst_2 : f32 to vector<1x1024xf32>
    %7 = arith.mulf %2, %6 : vector<1x1024xf32>
    %cst_3 = arith.constant 0.0204081628 : f32
    %8 = vector.broadcast %cst_3 : f32 to vector<1x1024xf32>
    %9 = arith.mulf %5, %8 : vector<1x1024xf32>
    %10 = arith.mulf %7, %7 : vector<1x1024xf32>
    %11 = arith.subf %9, %10 : vector<1x1024xf32>
    %cst_4 = arith.constant 9.99999974E-6 : f32
    %12 = vector.broadcast %cst_4 : f32 to vector<1x1024xf32>
    %13 = arith.addf %11, %12 : vector<1x1024xf32>
    %14 = math.rsqrt %13 : vector<1x1024xf32>
    %c0_5 = arith.constant 0 : index
    %c0_6 = arith.constant 0 : index
    %15 = vector.load %arg3[%c0_5, %c0_6] : memref<1x1024xf32, #tpu.memory_space<vmem>>, vector<1x1024xf32>
    %16 = arith.mulf %15, %14 : vector<1x1024xf32>
    %c0_7 = arith.constant 0 : index
    %c0_8 = arith.constant 0 : index
    %17 = vector.load %arg4[%c0_7, %c0_8] : memref<1x1024xf32, #tpu.memory_space<vmem>>, vector<1x1024xf32>
    %18 = arith.mulf %7, %16 : vector<1x1024xf32>
    %19 = arith.subf %17, %18 : vector<1x1024xf32>
    %20 = vector.broadcast %16 : vector<1x1024xf32> to vector<49x1024xf32>
    %21 = arith.mulf %0, %20 : vector<49x1024xf32>
    %22 = vector.broadcast %19 : vector<1x1024xf32> to vector<49x1024xf32>
    %23 = arith.addf %21, %22 : vector<49x1024xf32>
    %c0_9 = arith.constant 0 : index
    %c0_10 = arith.constant 0 : index
    %24 = vector.load %arg2[%c0_9, %c0_10] : memref<49x1024xf32, #tpu.memory_space<vmem>>, vector<49x1024xf32>
    %25 = arith.addf %23, %24 : vector<49x1024xf32>
    %cst_11 = arith.constant 0.000000e+00 : f32
    %26 = vector.broadcast %cst_11 : f32 to vector<49x1024xf32>
    %27 = arith.maximumf %25, %26 : vector<49x1024xf32>
    %c0_12 = arith.constant 0 : index
    %c0_13 = arith.constant 0 : index
    %28 = vector.load %arg5[%c0_12, %c0_13] : memref<49x1024xf32, #tpu.memory_space<vmem>>, vector<49x1024xf32>
    tpu.vector_store %arg5[%c0_12, %c0_13], %27 {strides = array<i32>} : memref<49x1024xf32, #tpu.memory_space<vmem>>, vector<49x1024xf32>,
    return
  }
  func.func @transform_0(%arg0: i32) -> (i32, i32) {
    %c0_i32 = arith.constant 0 : i32
    %c0_i32_0 = arith.constant 0 : i32
    return %c0_i32, %arg0 : i32, i32
  }
  func.func @transform_1(%arg0: i32) -> (i32, i32) {
    %c0_i32 = arith.constant 0 : i32
    %c0_i32_0 = arith.constant 0 : i32
    return %c0_i32, %arg0 : i32, i32
  }
  func.func @transform_2(%arg0: i32) -> (i32, i32) {
    %c0_i32 = arith.constant 0 : i32
    %c0_i32_0 = arith.constant 0 : i32
    return %c0_i32, %arg0 : i32, i32
  }
  func.func @transform_3(%arg0: i32) -> (i32, i32) {
    %c0_i32 = arith.constant 0 : i32
    %c0_i32_0 = arith.constant 0 : i32
    return %c0_i32, %arg0 : i32, i32
  }
  func.func @transform_4(%arg0: i32) -> (i32, i32) {
    %c0_i32 = arith.constant 0 : i32
    %c0_i32_0 = arith.constant 0 : i32
    return %c0_i32, %arg0 : i32, i32
  }
}

</mosaic_0001>

<llo_original>
// kernel: tpu_custom_call.1
$region0: #{tpu_custom_call.1}
  #allocation0 [shape = 'u32[]', space=smem, size = 0x4, offset = 0x4, fixed_abs, tag = 'smem constant byte address 0x4 - core index']
  #allocation1 [shape = 'u32[72,128]{1,0:T(1,128)}', space=vmem, size = 0x9000, scoped, tag = 'internal scratch']
  %s0 = inlined_call_operand.hbm [shape: f32[49,2048], index: 0, kind: input, shape index: {}]
  %s1 = inlined_call_operand.hbm [shape: f32[49,2048], index: 1, kind: input, shape index: {}]
  %s2 = inlined_call_operand.hbm [shape: f32[1,2048], index: 2, kind: input, shape index: {}]
  %s3 = inlined_call_operand.hbm [shape: f32[1,2048], index: 3, kind: input, shape index: {}]
  %s4 = inlined_call_operand.hbm [shape: f32[49,2048], index: 4, kind: output, shape index: {}]
  %s5 = sld [smem:[#allocation0]]
  $region65: #{tpu_custom_call.1} parent=0
    _
  %s7 = ssub.s32 1, %s5
  %s8 = scalar_select 0, %s7, %s5
  $region1: #{tpu_custom_call.1} parent=0
    #allocation2 [shape = 'u8[458752]{0}', space=vmem, size = 0x70000, scoped, tag = 'input window, operand 0']
    #allocation3 [shape = 's32[2]{0}', space=sflag, size = 0x8, scoped, tag = 'scoped memory for tpu_custom_call.1']
    #allocation4 [shape = 's32[2]{0}', space=sflag, size = 0x8, scoped, tag = 'scoped memory for tpu_custom_call.1']
    #allocation5 [shape = 'u8[458752]{0}', space=vmem, size = 0x70000, scoped, tag = 'input window, operand 1']
    #allocation6 [shape = 's32[2]{0}', space=sflag, size = 0x8, scoped, tag = 'scoped memory for tpu_custom_call.1']
    #allocation7 [shape = 'u8[8192]{0}', space=vmem, size = 0x2000, scoped, tag = 'input window, operand 2']
    #allocation8 [shape = 'u8[8192]{0}', space=vmem, size = 0x2000, scoped, tag = 'input window, operand 3']
    #allocation9 [shape = 's32[2]{0}', space=sflag, size = 0x8, scoped, tag = 'scoped memory for tpu_custom_call.1']
    #allocation10 [shape = 'u8[458752]{0}', space=vmem, size = 0x70000, scoped, tag = 'output window, operand 0']
    %9 = vsyncpa [#allocation3], 0
    %s10 = scalar_lea.sflag [#allocation3], 1
    %11 = vsyncpa %s10, 0
    %12 = vsyncpa [#allocation6], 0
    %s13 = scalar_lea.sflag [#allocation6], 1
    %14 = vsyncpa %s13, 0
    %15 = vsyncpa [#allocation9], 0
    %s16 = scalar_lea.sflag [#allocation9], 1
    %17 = vsyncpa %s16, 0
    %18 = vsyncpa [#allocation4], 0
    %s19 = scalar_lea.sflag [#allocation4], 1
    %20 = vsyncpa %s19, 0
    loop: start=0, step=1, limit=4
    $region2: #{tpu_custom_call.1} parent=1 // loop_pre_header
      _
    $region3: #{tpu_custom_call.1} parent=1 // loop_header
      %s22 = sphi 0, %s26
      %p23 = scmp.ge.s32.totalorder %s22, 4
      %s32 = sphi 0, %s34
      %s35 = sphi 0, %s32
      %s36 = sphi 0, %s35
      %s52 = sphi 0, %s36
      %s58 = sphi 0, %s60
      %s61 = sphi 0, %s58
      %s62 = sphi 0, %s61
      %s78 = sphi 0, %s62
      %s84 = sphi 0, %s86
      %s87 = sphi 0, %s84
      %s88 = sphi 0, %s87
      %s104 = sphi 0, %s88
      %s110 = sphi 0, %s112
      %s113 = sphi 0, %s110
      %s114 = sphi 0, %s113
      %s130 = sphi 0, %s114
      %s136 = sphi 0, %s138
      %s139 = sphi 0, %s136
      %s140 = sphi 0, %s139
      %s156 = sphi 0, %s140
    $region4: #{tpu_custom_call.1} parent=1 // loop_header_branch
      %25 = sbr.rel (%p23) target = $region8
    $region5: #{tpu_custom_call.1} parent=1 // loop_body
      %s27 = ssub.s32 %s22, 1
      %s28 = ssub.s32 %s22, 2
      %s29 = sadd.s32 %s22, 1
      %s30 = ssub.s32 %s22, %s29
      %p31 = scmp.eq.s32.totalorder %s30, 0
      %s33 = sadd.s32 %s32, 1
      %s34 = scalar_select %p31, %s32, %s33
      %p37 = pneg %p31
      %p38 = scmp.eq.s32.totalorder %s22, 1
      %p39 = por %p37, %p38
      %p40 = scmp.ne.s32.totalorder %s32, %s35
      %p41 = scmp.eq.s32.totalorder %s22, 0
      %p42 = por %p40, %p41
      %p43 = scmp.ne.s32.totalorder %s32, %s35
      %p44 = scmp.eq.s32.totalorder %s27, 1
      %p45 = por %p43, %p44
      %p46 = scmp.ne.s32.totalorder %s35, %s36
      %p47 = scmp.eq.s32.totalorder %s27, 0
      %p48 = por %p46, %p47
      %p49 = scmp.ne.s32.totalorder %s35, %s36
      %p50 = scmp.eq.s32.totalorder %s28, 1
      %p51 = por %p49, %p50
      %p53 = scmp.ne.s32.totalorder %s36, %s52
      %p54 = scmp.eq.s32.totalorder %s28, 0
      %p55 = por %p53, %p54
      %s56 = ssub.s32 %s22, %s29
      %p57 = scmp.eq.s32.totalorder %s56, 0
      %s59 = sadd.s32 %s58, 1
      %s60 = scalar_select %p57, %s58, %s59
      %p63 = pneg %p57
      %p64 = scmp.eq.s32.totalorder %s22, 1
      %p65 = por %p63, %p64
      %p66 = scmp.ne.s32.totalorder %s58, %s61
      %p67 = scmp.eq.s32.totalorder %s22, 0
      %p68 = por %p66, %p67
      %p69 = scmp.ne.s32.totalorder %s58, %s61
      %p70 = scmp.eq.s32.totalorder %s27, 1
      %p71 = por %p69, %p70
      %p72 = scmp.ne.s32.totalorder %s61, %s62
      %p73 = scmp.eq.s32.totalorder %s27, 0
      %p74 = por %p72, %p73
      %p75 = scmp.ne.s32.totalorder %s61, %s62
      %p76 = scmp.eq.s32.totalorder %s28, 1
      %p77 = por %p75, %p76
      %p79 = scmp.ne.s32.totalorder %s62, %s78
      %p80 = scmp.eq.s32.totalorder %s28, 0
      %p81 = por %p79, %p80
      %s82 = ssub.s32 %s22, %s29
      %p83 = scmp.eq.s32.totalorder %s82, 0
      %s85 = sadd.s32 %s84, 1
      %s86 = scalar_select %p83, %s84, %s85
      %p89 = pneg %p83
      %p90 = scmp.eq.s32.totalorder %s22, 1
      %p91 = por %p89, %p90
      %p92 = scmp.ne.s32.totalorder %s84, %s87
      %p93 = scmp.eq.s32.totalorder %s22, 0
      %p94 = por %p92, %p93
      %p95 = scmp.ne.s32.totalorder %s84, %s87
      %p96 = scmp.eq.s32.totalorder %s27, 1
      %p97 = por %p95, %p96
      %p98 = scmp.ne.s32.totalorder %s87, %s88
      %p99 = scmp.eq.s32.totalorder %s27, 0
      %p100 = por %p98, %p99
      %p101 = scmp.ne.s32.totalorder %s87, %s88
      %p102 = scmp.eq.s32.totalorder %s28, 1
      %p103 = por %p101, %p102
      %p105 = scmp.ne.s32.totalorder %s88, %s104
      %p106 = scmp.eq.s32.totalorder %s28, 0
      %p107 = por %p105, %p106
      %s108 = ssub.s32 %s22, %s29
      %p109 = scmp.eq.s32.totalorder %s108, 0
      %s111 = sadd.s32 %s110, 1
      %s112 = scalar_select %p109, %s110, %s111
      %p115 = pneg %p109
      %p116 = scmp.eq.s32.totalorder %s22, 1
      %p117 = por %p115, %p116
      %p118 = scmp.ne.s32.totalorder %s110, %s113
      %p119 = scmp.eq.s32.totalorder %s22, 0
      %p120 = por %p118, %p119
      %p121 = scmp.ne.s32.totalorder %s110, %s113
      %p122 = scmp.eq.s32.totalorder %s27, 1
      %p123 = por %p121, %p122
      %p124 = scmp.ne.s32.totalorder %s113, %s114
      %p125 = scmp.eq.s32.totalorder %s27, 0
      %p126 = por %p124, %p125
      %p127 = scmp.ne.s32.totalorder %s113, %s114
      %p128 = scmp.eq.s32.totalorder %s28, 1
      %p129 = por %p127, %p128
      %p131 = scmp.ne.s32.totalorder %s114, %s130
      %p132 = scmp.eq.s32.totalorder %s28, 0
      %p133 = por %p131, %p132
      %s134 = ssub.s32 %s22, %s29
      %p135 = scmp.eq.s32.totalorder %s134, 0
      %s137 = sadd.s32 %s136, 1
      %s138 = scalar_select %p135, %s136, %s137
      %p141 = pneg %p135
      %p142 = scmp.eq.s32.totalorder %s22, 1
      %p143 = por %p141, %p142
      %p144 = scmp.ne.s32.totalorder %s136, %s139
      %p145 = scmp.eq.s32.totalorder %s22, 0
      %p146 = por %p144, %p145
      %p147 = scmp.ne.s32.totalorder %s136, %s139
      %p148 = scmp.eq.s32.totalorder %s27, 1
      %p149 = por %p147, %p148
      %p150 = scmp.ne.s32.totalorder %s139, %s140
      %p151 = scmp.eq.s32.totalorder %s27, 0
      %p152 = por %p150, %p151
      %p153 = scmp.ne.s32.totalorder %s139, %s140
      %p154 = scmp.eq.s32.totalorder %s28, 1
      %p155 = por %p153, %p154
      %p157 = scmp.ne.s32.totalorder %s140, %s156
      %p158 = scmp.eq.s32.totalorder %s28, 0
      %p159 = por %p157, %p158
      %p160 = scmp.le.s32.totalorder 1, %s22
      %p161 = scmp.lt.s32.totalorder %s22, 3
      %p162 = pnand %p160, %p161
      %p163 = pneg %p162
      // Predicated region
      $region9: #{tpu_custom_call.1} parent=5 // pred_check
        _
      $region10: #{tpu_custom_call.1} parent=5 // pred_check_branch
        %165 = sbr.rel (%p162) target = $region12
      $region11: #{tpu_custom_call.1} parent=5 // pred_region
        %s166 = ssub.s32 %s22, 1
      $region12: #{tpu_custom_call.1} parent=5 // pred_fallthru
        _
      %p167 = scmp.lt.s32.totalorder %s22, 2
      // Predicated region
      $region13: #{tpu_custom_call.1} parent=5 // pred_check
        %p168 = pneg %p167
      $region14: #{tpu_custom_call.1} parent=5 // pred_check_branch
        %170 = sbr.rel (%p168) target = $region16
      $region15: #{tpu_custom_call.1} parent=5 // pred_region
        // Predicated region
        $region17: #{tpu_custom_call.1} parent=15 // pred_check
          %p171 = pneg %p42
        $region18: #{tpu_custom_call.1} parent=15 // pred_check_branch
          %173 = sbr.rel (%p171) target = $region20
        $region19: #{tpu_custom_call.1} parent=15 // pred_region
          %s174 = sand.u32 %s32, 1
          %s175 = scalar_lea.sflag [#allocation3], %s174
          %s176 = sand.u32 %s32, 1
          %s177 = smul.addr %s176, 448
          %s178 = scalar_lea.vmem [#allocation2], %s177
          %s179 = smul.u32 8, %s22
          %181 = vsyncadd %s175, 0
          %s182 = smul.addr %s179, 8
          %s183 = scalar_lea.hbm %s0, %s182
          %s184 = sshll.u32 %s183, 4
          %s185 = int_to_ptr.hbm [resolvable:$true] %s184
          %s186 = sshll.u32 %s178, 4
          %s187 = int_to_ptr.vmem [resolvable:$true] %s186
          %192 = dma.hbm_to_vmem [thread:$0]  %s185, 7168, %s187, %s175, 2048, 1024, 64
        $region20: #{tpu_custom_call.1} parent=15 // pred_fallthru
          _
        // Predicated region
        $region21: #{tpu_custom_call.1} parent=15 // pred_check
          %p193 = pneg %p68
        $region22: #{tpu_custom_call.1} parent=15 // pred_check_branch
          %195 = sbr.rel (%p193) target = $region24
        $region23: #{tpu_custom_call.1} parent=15 // pred_region
          %s196 = sand.u32 %s22, 1
          %s197 = scalar_lea.sflag [#allocation6], %s196
          %s198 = sand.u32 %s58, 1
          %s199 = smul.addr %s198, 448
          %s200 = scalar_lea.vmem [#allocation5], %s199
          %s201 = smul.u32 8, %s22
          %203 = vsyncadd %s197, 0
          %s204 = smul.addr %s201, 8
          %s205 = scalar_lea.hbm %s1, %s204
          %s206 = sshll.u32 %s205, 4
          %s207 = int_to_ptr.hbm [resolvable:$true] %s206
          %s208 = sshll.u32 %s200, 4
          %s209 = int_to_ptr.vmem [resolvable:$true] %s208
          %214 = dma.hbm_to_vmem [thread:$0]  %s207, 7168, %s209, %s197, 2048, 1024, 64
        $region24: #{tpu_custom_call.1} parent=15 // pred_fallthru
          _
        // Predicated region
        $region25: #{tpu_custom_call.1} parent=15 // pred_check
          %p215 = pneg %p94
        $region26: #{tpu_custom_call.1} parent=15 // pred_check_branch
          %217 = sbr.rel (%p215) target = $region28
        $region27: #{tpu_custom_call.1} parent=15 // pred_region
          %s218 = sand.u32 %s22, 1
          %s219 = scalar_lea.sflag [#allocation6], %s218
          %s220 = sand.u32 %s84, 1
          %s221 = smul.addr %s220, 8
          %s222 = scalar_lea.vmem [#allocation7], %s221
          %s223 = smul.u32 8, %s22
          %225 = vsyncadd %s219, 0
          %s226 = scalar_lea.hbm %s2, %s223
          %s228 = sshll.u32 %s226, 4
          %s229 = int_to_ptr.hbm [resolvable:$true] %s228
          %s230 = sshll.u32 %s222, 4
          %s231 = int_to_ptr.vmem [resolvable:$true] %s230
          %233 = dma.hbm_to_vmem [thread:$0]  %s229, 128, %s231, %s219
        $region28: #{tpu_custom_call.1} parent=15 // pred_fallthru
          _
        // Predicated region
        $region29: #{tpu_custom_call.1} parent=15 // pred_check
          %p234 = pneg %p120
        $region30: #{tpu_custom_call.1} parent=15 // pred_check_branch
          %236 = sbr.rel (%p234) target = $region32
        $region31: #{tpu_custom_call.1} parent=15 // pred_region
          %s237 = sand.u32 %s110, 1
          %s238 = scalar_lea.sflag [#allocation9], %s237
          %s239 = sand.u32 %s110, 1
          %s240 = smul.addr %s239, 8
          %s241 = scalar_lea.vmem [#allocation8], %s240
          %s242 = smul.u32 8, %s22
          %244 = vsyncadd %s238, 0
          %s245 = scalar_lea.hbm %s3, %s242
          %s247 = sshll.u32 %s245, 4
          %s248 = int_to_ptr.hbm [resolvable:$true] %s247
          %s249 = sshll.u32 %s241, 4
          %s250 = int_to_ptr.vmem [resolvable:$true] %s249
          %252 = dma.hbm_to_vmem [thread:$0]  %s248, 128, %s250, %s238
        $region32: #{tpu_custom_call.1} parent=15 // pred_fallthru
          _
      $region16: #{tpu_custom_call.1} parent=5 // pred_fallthru
        _
      %p253 = scmp.le.s32.totalorder 1, %s22
      %p254 = scmp.lt.s32.totalorder %s22, 3
      %p255 = pnand %p253, %p254
      %p256 = pneg %p255
      // Predicated region
      $region33: #{tpu_custom_call.1} parent=5 // pred_check
        _
      $region34: #{tpu_custom_call.1} parent=5 // pred_check_branch
        %258 = sbr.rel (%p255) target = $region36
      $region35: #{tpu_custom_call.1} parent=5 // pred_region
        %s259 = ssub.s32 %s22, 1
        %s260 = sand.u32 %s35, 1
        %s261 = scalar_lea.sflag [#allocation3], %s260
        %s262 = sand.u32 %s35, 1
        %s263 = smul.addr %s262, 448
        %s264 = scalar_lea.vmem [#allocation2], %s263
        // Predicated region
        $region37: #{tpu_custom_call.1} parent=35 // pred_check
          %p265 = pneg %p48
        $region38: #{tpu_custom_call.1} parent=35 // pred_check_branch
          %267 = sbr.rel (%p265) target = $region40
        $region39: #{tpu_custom_call.1} parent=35 // pred_region
          %269 = dma.done %s261, 7168
        $region40: #{tpu_custom_call.1} parent=35 // pred_fallthru
          _
        %s270 = sand.u32 %s27, 1
        %s271 = scalar_lea.sflag [#allocation6], %s270
        %s272 = sand.u32 %s61, 1
        %s273 = smul.addr %s272, 448
        %s274 = scalar_lea.vmem [#allocation5], %s273
        // Predicated region
        $region41: #{tpu_custom_call.1} parent=35 // pred_check
          %p275 = pneg %p74
        $region42: #{tpu_custom_call.1} parent=35 // pred_check_branch
          %277 = sbr.rel (%p275) target = $region44
        $region43: #{tpu_custom_call.1} parent=35 // pred_region
          %279 = dma.done %s271, 7168
        $region44: #{tpu_custom_call.1} parent=35 // pred_fallthru
          _
        %s280 = sand.u32 %s27, 1
        %s281 = scalar_lea.sflag [#allocation6], %s280
        %s282 = sand.u32 %s87, 1
        %s283 = smul.addr %s282, 8
        %s284 = scalar_lea.vmem [#allocation7], %s283
        // Predicated region
        $region45: #{tpu_custom_call.1} parent=35 // pred_check
          %p285 = pneg %p100
        $region46: #{tpu_custom_call.1} parent=35 // pred_check_branch
          %287 = sbr.rel (%p285) target = $region48
        $region47: #{tpu_custom_call.1} parent=35 // pred_region
          %289 = dma.done %s281, 128
        $region48: #{tpu_custom_call.1} parent=35 // pred_fallthru
          _
        %s290 = sand.u32 %s113, 1
        %s291 = scalar_lea.sflag [#allocation9], %s290
        %s292 = sand.u32 %s113, 1
        %s293 = smul.addr %s292, 8
        %s294 = scalar_lea.vmem [#allocation8], %s293
        // Predicated region
        $region49: #{tpu_custom_call.1} parent=35 // pred_check
          %p295 = pneg %p126
        $region50: #{tpu_custom_call.1} parent=35 // pred_check_branch
          %297 = sbr.rel (%p295) target = $region52
        $region51: #{tpu_custom_call.1} parent=35 // pred_region
          %299 = dma.done %s291, 128
        $region52: #{tpu_custom_call.1} parent=35 // pred_fallthru
          _
        %s300 = sand.u32 %s35, 1
        %s301 = scalar_lea.sflag [#allocation3], %s300
        %s302 = sand.u32 %s35, 1
        %s303 = smul.addr %s302, 448
        %s304 = scalar_lea.vmem [#allocation2], %s303
        %p305 = pneg %p48
        %p306 = pneg %p45
        %s307 = sand.u32 %s27, 1
        %s308 = scalar_lea.sflag [#allocation6], %s307
        %s309 = sand.u32 %s61, 1
        %s310 = smul.addr %s309, 448
        %s311 = scalar_lea.vmem [#allocation5], %s310
        %p312 = pneg %p74
        %p313 = pneg %p71
        %s314 = sand.u32 %s27, 1
        %s315 = scalar_lea.sflag [#allocation6], %s314
        %s316 = sand.u32 %s87, 1
        %s317 = smul.addr %s316, 8
        %s318 = scalar_lea.vmem [#allocation7], %s317
        %p319 = pneg %p100
        %p320 = pneg %p97
        %s321 = sand.u32 %s113, 1
        %s322 = scalar_lea.sflag [#allocation9], %s321
        %s323 = sand.u32 %s113, 1
        %s324 = smul.addr %s323, 8
        %s325 = scalar_lea.vmem [#allocation8], %s324
        %p326 = pneg %p126
        %p327 = pneg %p123
        %p328 = pneg %p152
        %p329 = pneg %p149
        %s330 = sand.u32 %s139, 1
        %s331 = scalar_lea.sflag [#allocation4], %s330
        %s332 = sand.u32 %s139, 1
        %s333 = smul.addr %s332, 448
        %s334 = scalar_lea.vmem [#allocation10], %s333
        %s335 = smul.u32 8, %s27
        %s336 = smul.u32 8, %s27
        %s337 = smul.u32 8, %s27
        %s338 = smul.u32 8, %s27
        %s339 = smul.u32 8, %s27
        %v340 = vld [vmem:[%s264] sm:$0xff]
        %v341 = vld [vmem:[%s264 + $0x8] sm:$0xff]
        %v342 = vld [vmem:[%s264 + $0x10] sm:$0xff]
        %v343 = vld [vmem:[%s264 + $0x18] sm:$0xff]
        %v344 = vld [vmem:[%s264 + $0x20] sm:$0xff]
        %v345 = vld [vmem:[%s264 + $0x28] sm:$0xff]
        %v346 = vld [vmem:[%s264 + $0x30] sm:$0xff]
        %v347 = vld [vmem:[%s264 + $0x38] sm:$0xff]
        %v348 = vld [vmem:[%s264 + $0x40] sm:$0xff]
        %v349 = vld [vmem:[%s264 + $0x48] sm:$0xff]
        %v350 = vld [vmem:[%s264 + $0x50] sm:$0xff]
        %v351 = vld [vmem:[%s264 + $0x58] sm:$0xff]
        %v352 = vld [vmem:[%s264 + $0x60] sm:$0xff]
        %v353 = vld [vmem:[%s264 + $0x68] sm:$0xff]
        %v354 = vld [vmem:[%s264 + $0x70] sm:$0xff]
        %v355 = vld [vmem:[%s264 + $0x78] sm:$0xff]
        %v356 = vld [vmem:[%s264 + $0x80] sm:$0xff]
        %v357 = vld [vmem:[%s264 + $0x88] sm:$0xff]
        %v358 = vld [vmem:[%s264 + $0x90] sm:$0xff]
        %v359 = vld [vmem:[%s264 + $0x98] sm:$0xff]
        %v360 = vld [vmem:[%s264 + $0xa0] sm:$0xff]
        %v361 = vld [vmem:[%s264 + $0xa8] sm:$0xff]
        %v362 = vld [vmem:[%s264 + $0xb0] sm:$0xff]
        %v363 = vld [vmem:[%s264 + $0xb8] sm:$0xff]
        %v364 = vld [vmem:[%s264 + $0xc0] sm:$0xff]
        %v365 = vld [vmem:[%s264 + $0xc8] sm:$0xff]
        %v366 = vld [vmem:[%s264 + $0xd0] sm:$0xff]
        %v367 = vld [vmem:[%s264 + $0xd8] sm:$0xff]
        %v368 = vld [vmem:[%s264 + $0xe0] sm:$0xff]
        %v369 = vld [vmem:[%s264 + $0xe8] sm:$0xff]
        %v370 = vld [vmem:[%s264 + $0xf0] sm:$0xff]
        %v371 = vld [vmem:[%s264 + $0xf8] sm:$0xff]
        %v372 = vld [vmem:[%s264 + $0x100] sm:$0xff]
        %v373 = vld [vmem:[%s264 + $0x108] sm:$0xff]
        %v374 = vld [vmem:[%s264 + $0x110] sm:$0xff]
        %v375 = vld [vmem:[%s264 + $0x118] sm:$0xff]
        %v376 = vld [vmem:[%s264 + $0x120] sm:$0xff]
        %v377 = vld [vmem:[%s264 + $0x128] sm:$0xff]
        %v378 = vld [vmem:[%s264 + $0x130] sm:$0xff]
        %v379 = vld [vmem:[%s264 + $0x138] sm:$0xff]
        %v380 = vld [vmem:[%s264 + $0x140] sm:$0xff]
        %v381 = vld [vmem:[%s264 + $0x148] sm:$0xff]
        %v382 = vld [vmem:[%s264 + $0x150] sm:$0xff]
        %v383 = vld [vmem:[%s264 + $0x158] sm:$0xff]
        %v384 = vld [vmem:[%s264 + $0x160] sm:$0xff]
        %v385 = vld [vmem:[%s264 + $0x168] sm:$0xff]
        %v386 = vld [vmem:[%s264 + $0x170] sm:$0xff]
        %v387 = vld [vmem:[%s264 + $0x178] sm:$0xff]
        %v388 = vld [vmem:[%s264 + $0x180] sm:$0x1]
        %v389 = vld [vmem:[%s264 + $0x188] sm:$0x1]
        %v390 = vld [vmem:[%s264 + $0x190] sm:$0x1]
        %v391 = vld [vmem:[%s264 + $0x198] sm:$0x1]
        %v392 = vld [vmem:[%s264 + $0x1a0] sm:$0x1]
        %v393 = vld [vmem:[%s264 + $0x1a8] sm:$0x1]
        %v394 = vld [vmem:[%s264 + $0x1b0] sm:$0x1]
        %v395 = vld [vmem:[%s264 + $0x1b8] sm:$0x1]
        %v396 = vadd.f32 %v340, %v348
        %v397 = vadd.f32 %v396, %v356
        %v398 = vadd.f32 %v397, %v364
        %v399 = vadd.f32 %v398, %v372
        %v400 = vadd.f32 %v399, %v380
        %vm401 = vcmask 1040384
        %v402 = vsel %vm401, %v388, 0.0
        %v403 = vadd.f32 %v400, %v402
        %v404 = vrot.slane %v403, 4
        %v405 = vadd.f32 %v403, %v404
        %v406 = vrot.slane %v405, 2
        %v407 = vadd.f32 %v405, %v406
        %v408 = vrot.slane %v407, 1
        %v409 = vadd.f32 %v407, %v408
        %v410 = vadd.f32 %v341, %v349
        %v411 = vadd.f32 %v410, %v357
        %v412 = vadd.f32 %v411, %v365
        %v413 = vadd.f32 %v412, %v373
        %v414 = vadd.f32 %v413, %v381
        %v415 = vsel %vm401, %v389, 0.0
        %v416 = vadd.f32 %v414, %v415
        %v417 = vrot.slane %v416, 4
        %v418 = vadd.f32 %v416, %v417
        %v419 = vrot.slane %v418, 2
        %v420 = vadd.f32 %v418, %v419
        %v421 = vrot.slane %v420, 1
        %v422 = vadd.f32 %v420, %v421
        %v423 = vadd.f32 %v342, %v350
        %v424 = vadd.f32 %v423, %v358
        %v425 = vadd.f32 %v424, %v366
        %v426 = vadd.f32 %v425, %v374
        %v427 = vadd.f32 %v426, %v382
        %v428 = vsel %vm401, %v390, 0.0
        %v429 = vadd.f32 %v427, %v428
        %v430 = vrot.slane %v429, 4
        %v431 = vadd.f32 %v429, %v430
        %v432 = vrot.slane %v431, 2
        %v433 = vadd.f32 %v431, %v432
        %v434 = vrot.slane %v433, 1
        %v435 = vadd.f32 %v433, %v434
        %v436 = vadd.f32 %v343, %v351
        %v437 = vadd.f32 %v436, %v359
        %v438 = vadd.f32 %v437, %v367
        %v439 = vadd.f32 %v438, %v375
        %v440 = vadd.f32 %v439, %v383
        %v441 = vsel %vm401, %v391, 0.0
        %v442 = vadd.f32 %v440, %v441
        %v443 = vrot.slane %v442, 4
        %v444 = vadd.f32 %v442, %v443
        %v445 = vrot.slane %v444, 2
        %v446 = vadd.f32 %v444, %v445
        %v447 = vrot.slane %v446, 1
        %v448 = vadd.f32 %v446, %v447
        %v449 = vadd.f32 %v344, %v352
        %v450 = vadd.f32 %v449, %v360
        %v451 = vadd.f32 %v450, %v368
        %v452 = vadd.f32 %v451, %v376
        %v453 = vadd.f32 %v452, %v384
        %v454 = vsel %vm401, %v392, 0.0
        %v455 = vadd.f32 %v453, %v454
        %v456 = vrot.slane %v455, 4
        %v457 = vadd.f32 %v455, %v456
        %v458 = vrot.slane %v457, 2
        %v459 = vadd.f32 %v457, %v458
        %v460 = vrot.slane %v459, 1
        %v461 = vadd.f32 %v459, %v460
        %v462 = vadd.f32 %v345, %v353
        %v463 = vadd.f32 %v462, %v361
        %v464 = vadd.f32 %v463, %v369
        %v465 = vadd.f32 %v464, %v377
        %v466 = vadd.f32 %v465, %v385
        %v467 = vsel %vm401, %v393, 0.0
        %v468 = vadd.f32 %v466, %v467
        %v469 = vrot.slane %v468, 4
        %v470 = vadd.f32 %v468, %v469
        %v471 = vrot.slane %v470, 2
        %v472 = vadd.f32 %v470, %v471
        %v473 = vrot.slane %v472, 1
        %v474 = vadd.f32 %v472, %v473
        %v475 = vadd.f32 %v346, %v354
        %v476 = vadd.f32 %v475, %v362
        %v477 = vadd.f32 %v476, %v370
        %v478 = vadd.f32 %v477, %v378
        %v479 = vadd.f32 %v478, %v386
        %v480 = vsel %vm401, %v394, 0.0
        %v481 = vadd.f32 %v479, %v480
        %v482 = vrot.slane %v481, 4
        %v483 = vadd.f32 %v481, %v482
        %v484 = vrot.slane %v483, 2
        %v485 = vadd.f32 %v483, %v484
        %v486 = vrot.slane %v485, 1
        %v487 = vadd.f32 %v485, %v486
        %v488 = vadd.f32 %v347, %v355
        %v489 = vadd.f32 %v488, %v363
        %v490 = vadd.f32 %v489, %v371
        %v491 = vadd.f32 %v490, %v379
        %v492 = vadd.f32 %v491, %v387
        %v493 = vsel %vm401, %v395, 0.0
        %v494 = vadd.f32 %v492, %v493
        %v495 = vrot.slane %v494, 4
        %v496 = vadd.f32 %v494, %v495
        %v497 = vrot.slane %v496, 2
        %v498 = vadd.f32 %v496, %v497
        %v499 = vrot.slane %v498, 1
        %v500 = vadd.f32 %v498, %v499
        %v501 = vmul.f32 %v340, %v340
        %v502 = vmul.f32 %v341, %v341
        %v503 = vmul.f32 %v342, %v342
        %v504 = vmul.f32 %v343, %v343
        %v505 = vmul.f32 %v344, %v344
        %v506 = vmul.f32 %v345, %v345
        %v507 = vmul.f32 %v346, %v346
        %v508 = vmul.f32 %v347, %v347
        %v509 = vmul.f32 %v348, %v348
        %v510 = vmul.f32 %v349, %v349
        %v511 = vmul.f32 %v350, %v350
        %v512 = vmul.f32 %v351, %v351
        %v513 = vmul.f32 %v352, %v352
        %v514 = vmul.f32 %v353, %v353
        %v515 = vmul.f32 %v354, %v354
        %v516 = vmul.f32 %v355, %v355
        %v517 = vmul.f32 %v356, %v356
        %v518 = vmul.f32 %v357, %v357
        %v519 = vmul.f32 %v358, %v358
        %v520 = vmul.f32 %v359, %v359
        %v521 = vmul.f32 %v360, %v360
        %v522 = vmul.f32 %v361, %v361
        %v523 = vmul.f32 %v362, %v362
        %v524 = vmul.f32 %v363, %v363
        %v525 = vmul.f32 %v364, %v364
        %v526 = vmul.f32 %v365, %v365
        %v527 = vmul.f32 %v366, %v366
        %v528 = vmul.f32 %v367, %v367
        %v529 = vmul.f32 %v368, %v368
        %v530 = vmul.f32 %v369, %v369
        %v531 = vmul.f32 %v370, %v370
        %v532 = vmul.f32 %v371, %v371
        %v533 = vmul.f32 %v372, %v372
        %v534 = vmul.f32 %v373, %v373
        %v535 = vmul.f32 %v374, %v374
        %v536 = vmul.f32 %v375, %v375
        %v537 = vmul.f32 %v376, %v376
        %v538 = vmul.f32 %v377, %v377
        %v539 = vmul.f32 %v378, %v378
        %v540 = vmul.f32 %v379, %v379
        %v541 = vmul.f32 %v380, %v380
        %v542 = vmul.f32 %v381, %v381
        %v543 = vmul.f32 %v382, %v382
        %v544 = vmul.f32 %v383, %v383
        %v545 = vmul.f32 %v384, %v384
        %v546 = vmul.f32 %v385, %v385
        %v547 = vmul.f32 %v386, %v386
        %v548 = vmul.f32 %v387, %v387
        %v549 = vmul.f32 %v388, %v388
        %v550 = vmul.f32 %v389, %v389
        %v551 = vmul.f32 %v390, %v390
        %v552 = vmul.f32 %v391, %v391
        %v553 = vmul.f32 %v392, %v392
        %v554 = vmul.f32 %v393, %v393
        %v555 = vmul.f32 %v394, %v394
        %v556 = vmul.f32 %v395, %v395
        %v557 = vadd.f32 %v501, %v509
        %v558 = vadd.f32 %v557, %v517
        %v559 = vadd.f32 %v558, %v525
        %v560 = vadd.f32 %v559, %v533
        %v561 = vadd.f32 %v560, %v541
        %v562 = vsel %vm401, %v549, 0.0
        %v563 = vadd.f32 %v561, %v562
        %v564 = vrot.slane %v563, 4
        %v565 = vadd.f32 %v563, %v564
        %v566 = vrot.slane %v565, 2
        %v567 = vadd.f32 %v565, %v566
        %v568 = vrot.slane %v567, 1
        %v569 = vadd.f32 %v567, %v568
        %v570 = vadd.f32 %v502, %v510
        %v571 = vadd.f32 %v570, %v518
        %v572 = vadd.f32 %v571, %v526
        %v573 = vadd.f32 %v572, %v534
        %v574 = vadd.f32 %v573, %v542
        %v575 = vsel %vm401, %v550, 0.0
        %v576 = vadd.f32 %v574, %v575
        %v577 = vrot.slane %v576, 4
        %v578 = vadd.f32 %v576, %v577
        %v579 = vrot.slane %v578, 2
        %v580 = vadd.f32 %v578, %v579
        %v581 = vrot.slane %v580, 1
        %v582 = vadd.f32 %v580, %v581
        %v583 = vadd.f32 %v503, %v511
        %v584 = vadd.f32 %v583, %v519
        %v585 = vadd.f32 %v584, %v527
        %v586 = vadd.f32 %v585, %v535
        %v587 = vadd.f32 %v586, %v543
        %v588 = vsel %vm401, %v551, 0.0
        %v589 = vadd.f32 %v587, %v588
        %v590 = vrot.slane %v589, 4
        %v591 = vadd.f32 %v589, %v590
        %v592 = vrot.slane %v591, 2
        %v593 = vadd.f32 %v591, %v592
        %v594 = vrot.slane %v593, 1
        %v595 = vadd.f32 %v593, %v594
        %v596 = vadd.f32 %v504, %v512
        %v597 = vadd.f32 %v596, %v520
        %v598 = vadd.f32 %v597, %v528
        %v599 = vadd.f32 %v598, %v536
        %v600 = vadd.f32 %v599, %v544
        %v601 = vsel %vm401, %v552, 0.0
        %v602 = vadd.f32 %v600, %v601
        %v603 = vrot.slane %v602, 4
        %v604 = vadd.f32 %v602, %v603
        %v605 = vrot.slane %v604, 2
        %v606 = vadd.f32 %v604, %v605
        %v607 = vrot.slane %v606, 1
        %v608 = vadd.f32 %v606, %v607
        %v609 = vadd.f32 %v505, %v513
        %v610 = vadd.f32 %v609, %v521
        %v611 = vadd.f32 %v610, %v529
        %v612 = vadd.f32 %v611, %v537
        %v613 = vadd.f32 %v612, %v545
        %v614 = vsel %vm401, %v553, 0.0
        %v615 = vadd.f32 %v613, %v614
        %v616 = vrot.slane %v615, 4
        %v617 = vadd.f32 %v615, %v616
        %v618 = vrot.slane %v617, 2
        %v619 = vadd.f32 %v617, %v618
        %v620 = vrot.slane %v619, 1
        %v621 = vadd.f32 %v619, %v620
        %v622 = vadd.f32 %v506, %v514
        %v623 = vadd.f32 %v622, %v522
        %v624 = vadd.f32 %v623, %v530
        %v625 = vadd.f32 %v624, %v538
        %v626 = vadd.f32 %v625, %v546
        %v627 = vsel %vm401, %v554, 0.0
        %v628 = vadd.f32 %v626, %v627
        %v629 = vrot.slane %v628, 4
        %v630 = vadd.f32 %v628, %v629
        %v631 = vrot.slane %v630, 2
        %v632 = vadd.f32 %v630, %v631
        %v633 = vrot.slane %v632, 1
        %v634 = vadd.f32 %v632, %v633
        %v635 = vadd.f32 %v507, %v515
        %v636 = vadd.f32 %v635, %v523
        %v637 = vadd.f32 %v636, %v531
        %v638 = vadd.f32 %v637, %v539
        %v639 = vadd.f32 %v638, %v547
        %v640 = vsel %vm401, %v555, 0.0
        %v641 = vadd.f32 %v639, %v640
        %v642 = vrot.slane %v641, 4
        %v643 = vadd.f32 %v641, %v642
        %v644 = vrot.slane %v643, 2
        %v645 = vadd.f32 %v643, %v644
        %v646 = vrot.slane %v645, 1
        %v647 = vadd.f32 %v645, %v646
        %v648 = vadd.f32 %v508, %v516
        %v649 = vadd.f32 %v648, %v524
        %v650 = vadd.f32 %v649, %v532
        %v651 = vadd.f32 %v650, %v540
        %v652 = vadd.f32 %v651, %v548
        %v653 = vsel %vm401, %v556, 0.0
        %v654 = vadd.f32 %v652, %v653
        %v655 = vrot.slane %v654, 4
        %v656 = vadd.f32 %v654, %v655
        %v657 = vrot.slane %v656, 2
        %v658 = vadd.f32 %v656, %v657
        %v659 = vrot.slane %v658, 1
        %v660 = vadd.f32 %v658, %v659
        %v661 = vmul.f32 %v409, 0.020408163
        %v662 = vmul.f32 %v422, 0.020408163
        %v663 = vmul.f32 %v435, 0.020408163
        %v664 = vmul.f32 %v448, 0.020408163
        %v665 = vmul.f32 %v461, 0.020408163
        %v666 = vmul.f32 %v474, 0.020408163
        %v667 = vmul.f32 %v487, 0.020408163
        %v668 = vmul.f32 %v500, 0.020408163
        %v669 = vmul.f32 %v569, 0.020408163
        %v670 = vmul.f32 %v582, 0.020408163
        %v671 = vmul.f32 %v595, 0.020408163
        %v672 = vmul.f32 %v608, 0.020408163
        %v673 = vmul.f32 %v621, 0.020408163
        %v674 = vmul.f32 %v634, 0.020408163
        %v675 = vmul.f32 %v647, 0.020408163
        %v676 = vmul.f32 %v660, 0.020408163
        %v677 = vmul.f32 %v661, %v661
        %v678 = vmul.f32 %v662, %v662
        %v679 = vmul.f32 %v663, %v663
        %v680 = vmul.f32 %v664, %v664
        %v681 = vmul.f32 %v665, %v665
        %v682 = vmul.f32 %v666, %v666
        %v683 = vmul.f32 %v667, %v667
        %v684 = vmul.f32 %v668, %v668
        %v685 = vsub.f32 %v669, %v677
        %v686 = vsub.f32 %v670, %v678
        %v687 = vsub.f32 %v671, %v679
        %v688 = vsub.f32 %v672, %v680
        %v689 = vsub.f32 %v673, %v681
        %v690 = vsub.f32 %v674, %v682
        %v691 = vsub.f32 %v675, %v683
        %v692 = vsub.f32 %v676, %v684
        %v693 = vadd.f32 %v685, 1e-05
        %v694 = vadd.f32 %v686, 1e-05
        %v695 = vadd.f32 %v687, 1e-05
        %v696 = vadd.f32 %v688, 1e-05
        %v697 = vadd.f32 %v689, 1e-05
        %v698 = vadd.f32 %v690, 1e-05
        %v699 = vadd.f32 %v691, 1e-05
        %v700 = vadd.f32 %v692, 1e-05
        %v701 = vrsqrt.pop %v693
        %v702 = vmul.f32 %v701, %v693
        %v703 = vmul.f32 %v702, %v701
        %v704 = vmul.f32 0.5, %v703
        %v705 = vsub.f32 1.5, %v704
        %v706 = vmul.f32 %v701, %v705
        %vm707 = vweird.f32 %v693
        %vm708 = vweird.f32 %v701
        %vm709 = vmor %vm707, %vm708
        %v710 = vsel %vm709, %v701, %v706
        %v711 = vrsqrt.pop %v694
        %v712 = vmul.f32 %v711, %v694
        %v713 = vmul.f32 %v712, %v711
        %v714 = vmul.f32 0.5, %v713
        %v715 = vsub.f32 1.5, %v714
        %v716 = vmul.f32 %v711, %v715
        %vm717 = vweird.f32 %v694
        %vm718 = vweird.f32 %v711
        %vm719 = vmor %vm717, %vm718
        %v720 = vsel %vm719, %v711, %v716
        %v721 = vrsqrt.pop %v695
        %v722 = vmul.f32 %v721, %v695
        %v723 = vmul.f32 %v722, %v721
        %v724 = vmul.f32 0.5, %v723
        %v725 = vsub.f32 1.5, %v724
        %v726 = vmul.f32 %v721, %v725
        %vm727 = vweird.f32 %v695
        %vm728 = vweird.f32 %v721
        %vm729 = vmor %vm727, %vm728
        %v730 = vsel %vm729, %v721, %v726
        %v731 = vrsqrt.pop %v696
        %v732 = vmul.f32 %v731, %v696
        %v733 = vmul.f32 %v732, %v731
        %v734 = vmul.f32 0.5, %v733
        %v735 = vsub.f32 1.5, %v734
        %v736 = vmul.f32 %v731, %v735
        %vm737 = vweird.f32 %v696
        %vm738 = vweird.f32 %v731
        %vm739 = vmor %vm737, %vm738
        %v740 = vsel %vm739, %v731, %v736
        %v741 = vrsqrt.pop %v697
        %v742 = vmul.f32 %v741, %v697
        %v743 = vmul.f32 %v742, %v741
        %v744 = vmul.f32 0.5, %v743
        %v745 = vsub.f32 1.5, %v744
        %v746 = vmul.f32 %v741, %v745
        %vm747 = vweird.f32 %v697
        %vm748 = vweird.f32 %v741
        %vm749 = vmor %vm747, %vm748
        %v750 = vsel %vm749, %v741, %v746
        %v751 = vrsqrt.pop %v698
        %v752 = vmul.f32 %v751, %v698
        %v753 = vmul.f32 %v752, %v751
        %v754 = vmul.f32 0.5, %v753
        %v755 = vsub.f32 1.5, %v754
        %v756 = vmul.f32 %v751, %v755
        %vm757 = vweird.f32 %v698
        %vm758 = vweird.f32 %v751
        %vm759 = vmor %vm757, %vm758
        %v760 = vsel %vm759, %v751, %v756
        %v761 = vrsqrt.pop %v699
        %v762 = vmul.f32 %v761, %v699
        %v763 = vmul.f32 %v762, %v761
        %v764 = vmul.f32 0.5, %v763
        %v765 = vsub.f32 1.5, %v764
        %v766 = vmul.f32 %v761, %v765
        %vm767 = vweird.f32 %v699
        %vm768 = vweird.f32 %v761
        %vm769 = vmor %vm767, %vm768
        %v770 = vsel %vm769, %v761, %v766
        %v771 = vrsqrt.pop %v700
        %v772 = vmul.f32 %v771, %v700
        %v773 = vmul.f32 %v772, %v771
        %v774 = vmul.f32 0.5, %v773
        %v775 = vsub.f32 1.5, %v774
        %v776 = vmul.f32 %v771, %v775
        %vm777 = vweird.f32 %v700
        %vm778 = vweird.f32 %v771
        %vm779 = vmor %vm777, %vm778
        %v780 = vsel %vm779, %v771, %v776
        %v781 = vld [vmem:[%s284] sm:$0xff]
        %v790 = vrot.slane %v720, 7
        %v791 = vrot.slane %v730, 6
        %v792 = vrot.slane %v740, 5
        %v793 = vrot.slane %v750, 4
        %v794 = vrot.slane %v760, 3
        %v795 = vrot.slane %v770, 2
        %v796 = vrot.slane %v780, 1
        %v797 = vsel %vm401, %v710, %v790
        %vm798 = vcmask 1042434
        %v799 = vsel %vm798, %v791, %v792
        %vm800 = vcmask 1041408
        %v801 = vsel %vm800, %v797, %v799
        %vm802 = vcmask 1044484
        %v803 = vsel %vm802, %v793, %v794
        %vm804 = vcmask 1046534
        %v805 = vsel %vm804, %v795, %v796
        %vm806 = vcmask 1045508
        %v807 = vsel %vm806, %v803, %v805
        %vm808 = vcmask 1043456
        %v809 = vsel %vm808, %v801, %v807
        %v811 = vmul.f32 %v781, %v809
        %v812 = vld [vmem:[%s294] sm:$0xff]
        %v814 = vperm.slane %v811, 0
        %v815 = vperm.slane %v811, 1
        %v816 = vperm.slane %v811, 2
        %v817 = vperm.slane %v811, 3
        %v818 = vperm.slane %v811, 4
        %v819 = vperm.slane %v811, 5
        %v820 = vperm.slane %v811, 6
        %v821 = vperm.slane %v811, 7
        %v830 = vmul.f32 %v661, %v814
        %v831 = vmul.f32 %v662, %v815
        %v832 = vmul.f32 %v663, %v816
        %v833 = vmul.f32 %v664, %v817
        %v834 = vmul.f32 %v665, %v818
        %v835 = vmul.f32 %v666, %v819
        %v836 = vmul.f32 %v667, %v820
        %v837 = vmul.f32 %v668, %v821
        %v846 = vrot.slane %v831, 7
        %v847 = vrot.slane %v832, 6
        %v848 = vrot.slane %v833, 5
        %v849 = vrot.slane %v834, 4
        %v850 = vrot.slane %v835, 3
        %v851 = vrot.slane %v836, 2
        %v852 = vrot.slane %v837, 1
        %v853 = vsel %vm401, %v830, %v846
        %v854 = vsel %vm798, %v847, %v848
        %v855 = vsel %vm800, %v853, %v854
        %v856 = vsel %vm802, %v849, %v850
        %v857 = vsel %vm804, %v851, %v852
        %v858 = vsel %vm806, %v856, %v857
        %v859 = vsel %vm808, %v855, %v858
        %v861 = vsub.f32 %v812, %v859
        %v862 = vmul.f32 %v340, %v814
        %v863 = vmul.f32 %v341, %v815
        %v864 = vmul.f32 %v342, %v816
        %v865 = vmul.f32 %v343, %v817
        %v866 = vmul.f32 %v344, %v818
        %v867 = vmul.f32 %v345, %v819
        %v868 = vmul.f32 %v346, %v820
        %v869 = vmul.f32 %v347, %v821
        %v870 = vmul.f32 %v348, %v814
        %v871 = vmul.f32 %v349, %v815
        %v872 = vmul.f32 %v350, %v816
        %v873 = vmul.f32 %v351, %v817
        %v874 = vmul.f32 %v352, %v818
        %v875 = vmul.f32 %v353, %v819
        %v876 = vmul.f32 %v354, %v820
        %v877 = vmul.f32 %v355, %v821
        %v878 = vmul.f32 %v356, %v814
        %v879 = vmul.f32 %v357, %v815
        %v880 = vmul.f32 %v358, %v816
        %v881 = vmul.f32 %v359, %v817
        %v882 = vmul.f32 %v360, %v818
        %v883 = vmul.f32 %v361, %v819
        %v884 = vmul.f32 %v362, %v820
        %v885 = vmul.f32 %v363, %v821
        %v886 = vmul.f32 %v364, %v814
        %v887 = vmul.f32 %v365, %v815
        %v888 = vmul.f32 %v366, %v816
        %v889 = vmul.f32 %v367, %v817
        %v890 = vmul.f32 %v368, %v818
        %v891 = vmul.f32 %v369, %v819
        %v892 = vmul.f32 %v370, %v820
        %v893 = vmul.f32 %v371, %v821
        %v894 = vmul.f32 %v372, %v814
        %v895 = vmul.f32 %v373, %v815
        %v896 = vmul.f32 %v374, %v816
        %v897 = vmul.f32 %v375, %v817
        %v898 = vmul.f32 %v376, %v818
        %v899 = vmul.f32 %v377, %v819
        %v900 = vmul.f32 %v378, %v820
        %v901 = vmul.f32 %v379, %v821
        %v902 = vmul.f32 %v380, %v814
        %v903 = vmul.f32 %v381, %v815
        %v904 = vmul.f32 %v382, %v816
        %v905 = vmul.f32 %v383, %v817
        %v906 = vmul.f32 %v384, %v818
        %v907 = vmul.f32 %v385, %v819
        %v908 = vmul.f32 %v386, %v820
        %v909 = vmul.f32 %v387, %v821
        %v910 = vmul.f32 %v388, %v814
        %v911 = vmul.f32 %v389, %v815
        %v912 = vmul.f32 %v390, %v816
        %v913 = vmul.f32 %v391, %v817
        %v914 = vmul.f32 %v392, %v818
        %v915 = vmul.f32 %v393, %v819
        %v916 = vmul.f32 %v394, %v820
        %v917 = vmul.f32 %v395, %v821
        %v919 = vperm.slane %v861, 0
        %v920 = vperm.slane %v861, 1
        %v921 = vperm.slane %v861, 2
        %v922 = vperm.slane %v861, 3
        %v923 = vperm.slane %v861, 4
        %v924 = vperm.slane %v861, 5
        %v925 = vperm.slane %v861, 6
        %v926 = vperm.slane %v861, 7
        %v935 = vadd.f32 %v862, %v919
        %v936 = vadd.f32 %v863, %v920
        %v937 = vadd.f32 %v864, %v921
        %v938 = vadd.f32 %v865, %v922
        %v939 = vadd.f32 %v866, %v923
        %v940 = vadd.f32 %v867, %v924
        %v941 = vadd.f32 %v868, %v925
        %v942 = vadd.f32 %v869, %v926
        %v943 = vadd.f32 %v870, %v919
        %v944 = vadd.f32 %v871, %v920
        %v945 = vadd.f32 %v872, %v921
        %v946 = vadd.f32 %v873, %v922
        %v947 = vadd.f32 %v874, %v923
        %v948 = vadd.f32 %v875, %v924
        %v949 = vadd.f32 %v876, %v925
        %v950 = vadd.f32 %v877, %v926
        %v951 = vadd.f32 %v878, %v919
        %v952 = vadd.f32 %v879, %v920
        %v953 = vadd.f32 %v880, %v921
        %v954 = vadd.f32 %v881, %v922
        %v955 = vadd.f32 %v882, %v923
        %v956 = vadd.f32 %v883, %v924
        %v957 = vadd.f32 %v884, %v925
        %v958 = vadd.f32 %v885, %v926
        %v959 = vadd.f32 %v886, %v919
        %v960 = vadd.f32 %v887, %v920
        %v961 = vadd.f32 %v888, %v921
        %v962 = vadd.f32 %v889, %v922
        %v963 = vadd.f32 %v890, %v923
        %v964 = vadd.f32 %v891, %v924
        %v965 = vadd.f32 %v892, %v925
        %v966 = vadd.f32 %v893, %v926
        %v967 = vadd.f32 %v894, %v919
        %v968 = vadd.f32 %v895, %v920
        %v969 = vadd.f32 %v896, %v921
        %v970 = vadd.f32 %v897, %v922
        %v971 = vadd.f32 %v898, %v923
        %v972 = vadd.f32 %v899, %v924
        %v973 = vadd.f32 %v900, %v925
        %v974 = vadd.f32 %v901, %v926
        %v975 = vadd.f32 %v902, %v919
        %v976 = vadd.f32 %v903, %v920
        %v977 = vadd.f32 %v904, %v921
        %v978 = vadd.f32 %v905, %v922
        %v979 = vadd.f32 %v906, %v923
        %v980 = vadd.f32 %v907, %v924
        %v981 = vadd.f32 %v908, %v925
        %v982 = vadd.f32 %v909, %v926
        %v983 = vadd.f32 %v910, %v919
        %v984 = vadd.f32 %v911, %v920
        %v985 = vadd.f32 %v912, %v921
        %v986 = vadd.f32 %v913, %v922
        %v987 = vadd.f32 %v914, %v923
        %v988 = vadd.f32 %v915, %v924
        %v989 = vadd.f32 %v916, %v925
        %v990 = vadd.f32 %v917, %v926
        %v991 = vld [vmem:[%s274] sm:$0xff]
        %v992 = vld [vmem:[%s274 + $0x8] sm:$0xff]
        %v993 = vld [vmem:[%s274 + $0x10] sm:$0xff]
        %v994 = vld [vmem:[%s274 + $0x18] sm:$0xff]
        %v995 = vld [vmem:[%s274 + $0x20] sm:$0xff]
        %v996 = vld [vmem:[%s274 + $0x28] sm:$0xff]
        %v997 = vld [vmem:[%s274 + $0x30] sm:$0xff]
        %v998 = vld [vmem:[%s274 + $0x38] sm:$0xff]
        %v999 = vld [vmem:[%s274 + $0x40] sm:$0xff]
        %v1000 = vld [vmem:[%s274 + $0x48] sm:$0xff]
        %v1001 = vld [vmem:[%s274 + $0x50] sm:$0xff]
        %v1002 = vld [vmem:[%s274 + $0x58] sm:$0xff]
        %v1003 = vld [vmem:[%s274 + $0x60] sm:$0xff]
        %v1004 = vld [vmem:[%s274 + $0x68] sm:$0xff]
        %v1005 = vld [vmem:[%s274 + $0x70] sm:$0xff]
        %v1006 = vld [vmem:[%s274 + $0x78] sm:$0xff]
        %v1007 = vld [vmem:[%s274 + $0x80] sm:$0xff]
        %v1008 = vld [vmem:[%s274 + $0x88] sm:$0xff]
        %v1009 = vld [vmem:[%s274 + $0x90] sm:$0xff]
        %v1010 = vld [vmem:[%s274 + $0x98] sm:$0xff]
        %v1011 = vld [vmem:[%s274 + $0xa0] sm:$0xff]
        %v1012 = vld [vmem:[%s274 + $0xa8] sm:$0xff]
        %v1013 = vld [vmem:[%s274 + $0xb0] sm:$0xff]
        %v1014 = vld [vmem:[%s274 + $0xb8] sm:$0xff]
        %v1015 = vld [vmem:[%s274 + $0xc0] sm:$0xff]
        %v1016 = vld [vmem:[%s274 + $0xc8] sm:$0xff]
        %v1017 = vld [vmem:[%s274 + $0xd0] sm:$0xff]
        %v1018 = vld [vmem:[%s274 + $0xd8] sm:$0xff]
        %v1019 = vld [vmem:[%s274 + $0xe0] sm:$0xff]
        %v1020 = vld [vmem:[%s274 + $0xe8] sm:$0xff]
        %v1021 = vld [vmem:[%s274 + $0xf0] sm:$0xff]
        %v1022 = vld [vmem:[%s274 + $0xf8] sm:$0xff]
        %v1023 = vld [vmem:[%s274 + $0x100] sm:$0xff]
        %v1024 = vld [vmem:[%s274 + $0x108] sm:$0xff]
        %v1025 = vld [vmem:[%s274 + $0x110] sm:$0xff]
        %v1026 = vld [vmem:[%s274 + $0x118] sm:$0xff]
        %v1027 = vld [vmem:[%s274 + $0x120] sm:$0xff]
        %v1028 = vld [vmem:[%s274 + $0x128] sm:$0xff]
        %v1029 = vld [vmem:[%s274 + $0x130] sm:$0xff]
        %v1030 = vld [vmem:[%s274 + $0x138] sm:$0xff]
        %v1031 = vld [vmem:[%s274 + $0x140] sm:$0xff]
        %v1032 = vld [vmem:[%s274 + $0x148] sm:$0xff]
        %v1033 = vld [vmem:[%s274 + $0x150] sm:$0xff]
        %v1034 = vld [vmem:[%s274 + $0x158] sm:$0xff]
        %v1035 = vld [vmem:[%s274 + $0x160] sm:$0xff]
        %v1036 = vld [vmem:[%s274 + $0x168] sm:$0xff]
        %v1037 = vld [vmem:[%s274 + $0x170] sm:$0xff]
        %v1038 = vld [vmem:[%s274 + $0x178] sm:$0xff]
        %v1039 = vld [vmem:[%s274 + $0x180] sm:$0x1]
        %v1040 = vld [vmem:[%s274 + $0x188] sm:$0x1]
        %v1041 = vld [vmem:[%s274 + $0x190] sm:$0x1]
        %v1042 = vld [vmem:[%s274 + $0x198] sm:$0x1]
        %v1043 = vld [vmem:[%s274 + $0x1a0] sm:$0x1]
        %v1044 = vld [vmem:[%s274 + $0x1a8] sm:$0x1]
        %v1045 = vld [vmem:[%s274 + $0x1b0] sm:$0x1]
        %v1046 = vld [vmem:[%s274 + $0x1b8] sm:$0x1]
        %v1047 = vadd.f32 %v935, %v991
        %v1048 = vadd.f32 %v936, %v992
        %v1049 = vadd.f32 %v937, %v993
        %v1050 = vadd.f32 %v938, %v994
        %v1051 = vadd.f32 %v939, %v995
        %v1052 = vadd.f32 %v940, %v996
        %v1053 = vadd.f32 %v941, %v997
        %v1054 = vadd.f32 %v942, %v998
        %v1055 = vadd.f32 %v943, %v999
        %v1056 = vadd.f32 %v944, %v1000
        %v1057 = vadd.f32 %v945, %v1001
        %v1058 = vadd.f32 %v946, %v1002
        %v1059 = vadd.f32 %v947, %v1003
        %v1060 = vadd.f32 %v948, %v1004
        %v1061 = vadd.f32 %v949, %v1005
        %v1062 = vadd.f32 %v950, %v1006
        %v1063 = vadd.f32 %v951, %v1007
        %v1064 = vadd.f32 %v952, %v1008
        %v1065 = vadd.f32 %v953, %v1009
        %v1066 = vadd.f32 %v954, %v1010
        %v1067 = vadd.f32 %v955, %v1011
        %v1068 = vadd.f32 %v956, %v1012
        %v1069 = vadd.f32 %v957, %v1013
        %v1070 = vadd.f32 %v958, %v1014
        %v1071 = vadd.f32 %v959, %v1015
        %v1072 = vadd.f32 %v960, %v1016
        %v1073 = vadd.f32 %v961, %v1017
        %v1074 = vadd.f32 %v962, %v1018
        %v1075 = vadd.f32 %v963, %v1019
        %v1076 = vadd.f32 %v964, %v1020
        %v1077 = vadd.f32 %v965, %v1021
        %v1078 = vadd.f32 %v966, %v1022
        %v1079 = vadd.f32 %v967, %v1023
        %v1080 = vadd.f32 %v968, %v1024
        %v1081 = vadd.f32 %v969, %v1025
        %v1082 = vadd.f32 %v970, %v1026
        %v1083 = vadd.f32 %v971, %v1027
        %v1084 = vadd.f32 %v972, %v1028
        %v1085 = vadd.f32 %v973, %v1029
        %v1086 = vadd.f32 %v974, %v1030
        %v1087 = vadd.f32 %v975, %v1031
        %v1088 = vadd.f32 %v976, %v1032
        %v1089 = vadd.f32 %v977, %v1033
        %v1090 = vadd.f32 %v978, %v1034
        %v1091 = vadd.f32 %v979, %v1035
        %v1092 = vadd.f32 %v980, %v1036
        %v1093 = vadd.f32 %v981, %v1037
        %v1094 = vadd.f32 %v982, %v1038
        %v1095 = vadd.f32 %v983, %v1039
        %v1096 = vadd.f32 %v984, %v1040
        %v1097 = vadd.f32 %v985, %v1041
        %v1098 = vadd.f32 %v986, %v1042
        %v1099 = vadd.f32 %v987, %v1043
        %v1100 = vadd.f32 %v988, %v1044
        %v1101 = vadd.f32 %v989, %v1045
        %v1102 = vadd.f32 %v990, %v1046
        %v1103 = vmax.f32 %v1047, 0.0
        %v1104 = vmax.f32 %v1048, 0.0
        %v1105 = vmax.f32 %v1049, 0.0
        %v1106 = vmax.f32 %v1050, 0.0
        %v1107 = vmax.f32 %v1051, 0.0
        %v1108 = vmax.f32 %v1052, 0.0
        %v1109 = vmax.f32 %v1053, 0.0
        %v1110 = vmax.f32 %v1054, 0.0
        %v1111 = vmax.f32 %v1055, 0.0
        %v1112 = vmax.f32 %v1056, 0.0
        %v1113 = vmax.f32 %v1057, 0.0
        %v1114 = vmax.f32 %v1058, 0.0
        %v1115 = vmax.f32 %v1059, 0.0
        %v1116 = vmax.f32 %v1060, 0.0
        %v1117 = vmax.f32 %v1061, 0.0
        %v1118 = vmax.f32 %v1062, 0.0
        %v1119 = vmax.f32 %v1063, 0.0
        %v1120 = vmax.f32 %v1064, 0.0
        %v1121 = vmax.f32 %v1065, 0.0
        %v1122 = vmax.f32 %v1066, 0.0
        %v1123 = vmax.f32 %v1067, 0.0
        %v1124 = vmax.f32 %v1068, 0.0
        %v1125 = vmax.f32 %v1069, 0.0
        %v1126 = vmax.f32 %v1070, 0.0
        %v1127 = vmax.f32 %v1071, 0.0
        %v1128 = vmax.f32 %v1072, 0.0
        %v1129 = vmax.f32 %v1073, 0.0
        %v1130 = vmax.f32 %v1074, 0.0
        %v1131 = vmax.f32 %v1075, 0.0
        %v1132 = vmax.f32 %v1076, 0.0
        %v1133 = vmax.f32 %v1077, 0.0
        %v1134 = vmax.f32 %v1078, 0.0
        %v1135 = vmax.f32 %v1079, 0.0
        %v1136 = vmax.f32 %v1080, 0.0
        %v1137 = vmax.f32 %v1081, 0.0
        %v1138 = vmax.f32 %v1082, 0.0
        %v1139 = vmax.f32 %v1083, 0.0
        %v1140 = vmax.f32 %v1084, 0.0
        %v1141 = vmax.f32 %v1085, 0.0
        %v1142 = vmax.f32 %v1086, 0.0
        %v1143 = vmax.f32 %v1087, 0.0
        %v1144 = vmax.f32 %v1088, 0.0
        %v1145 = vmax.f32 %v1089, 0.0
        %v1146 = vmax.f32 %v1090, 0.0
        %v1147 = vmax.f32 %v1091, 0.0
        %v1148 = vmax.f32 %v1092, 0.0
        %v1149 = vmax.f32 %v1093, 0.0
        %v1150 = vmax.f32 %v1094, 0.0
        %v1151 = vmax.f32 %v1095, 0.0
        %v1152 = vmax.f32 %v1096, 0.0
        %v1153 = vmax.f32 %v1097, 0.0
        %v1154 = vmax.f32 %v1098, 0.0
        %v1155 = vmax.f32 %v1099, 0.0
        %v1156 = vmax.f32 %v1100, 0.0
        %v1157 = vmax.f32 %v1101, 0.0
        %v1158 = vmax.f32 %v1102, 0.0
        %1159 = vst [vmem:[%s334] sm:$0xff] %v1103
        %1160 = vst [vmem:[%s334 + $0x8] sm:$0xff] %v1104
        %1161 = vst [vmem:[%s334 + $0x10] sm:$0xff] %v1105
        %1162 = vst [vmem:[%s334 + $0x18] sm:$0xff] %v1106
        %1163 = vst [vmem:[%s334 + $0x20] sm:$0xff] %v1107
        %1164 = vst [vmem:[%s334 + $0x28] sm:$0xff] %v1108
        %1165 = vst [vmem:[%s334 + $0x30] sm:$0xff] %v1109
        %1166 = vst [vmem:[%s334 + $0x38] sm:$0xff] %v1110
        %1167 = vst [vmem:[%s334 + $0x40] sm:$0xff] %v1111
        %1168 = vst [vmem:[%s334 + $0x48] sm:$0xff] %v1112
        %1169 = vst [vmem:[%s334 + $0x50] sm:$0xff] %v1113
        %1170 = vst [vmem:[%s334 + $0x58] sm:$0xff] %v1114
        %1171 = vst [vmem:[%s334 + $0x60] sm:$0xff] %v1115
        %1172 = vst [vmem:[%s334 + $0x68] sm:$0xff] %v1116
        %1173 = vst [vmem:[%s334 + $0x70] sm:$0xff] %v1117
        %1174 = vst [vmem:[%s334 + $0x78] sm:$0xff] %v1118
        %1175 = vst [vmem:[%s334 + $0x80] sm:$0xff] %v1119
        %1176 = vst [vmem:[%s334 + $0x88] sm:$0xff] %v1120
        %1177 = vst [vmem:[%s334 + $0x90] sm:$0xff] %v1121
        %1178 = vst [vmem:[%s334 + $0x98] sm:$0xff] %v1122
        %1179 = vst [vmem:[%s334 + $0xa0] sm:$0xff] %v1123
        %1180 = vst [vmem:[%s334 + $0xa8] sm:$0xff] %v1124
        %1181 = vst [vmem:[%s334 + $0xb0] sm:$0xff] %v1125
        %1182 = vst [vmem:[%s334 + $0xb8] sm:$0xff] %v1126
        %1183 = vst [vmem:[%s334 + $0xc0] sm:$0xff] %v1127
        %1184 = vst [vmem:[%s334 + $0xc8] sm:$0xff] %v1128
        %1185 = vst [vmem:[%s334 + $0xd0] sm:$0xff] %v1129
        %1186 = vst [vmem:[%s334 + $0xd8] sm:$0xff] %v1130
        %1187 = vst [vmem:[%s334 + $0xe0] sm:$0xff] %v1131
        %1188 = vst [vmem:[%s334 + $0xe8] sm:$0xff] %v1132
        %1189 = vst [vmem:[%s334 + $0xf0] sm:$0xff] %v1133
        %1190 = vst [vmem:[%s334 + $0xf8] sm:$0xff] %v1134
        %1191 = vst [vmem:[%s334 + $0x100] sm:$0xff] %v1135
        %1192 = vst [vmem:[%s334 + $0x108] sm:$0xff] %v1136
        %1193 = vst [vmem:[%s334 + $0x110] sm:$0xff] %v1137
        %1194 = vst [vmem:[%s334 + $0x118] sm:$0xff] %v1138
        %1195 = vst [vmem:[%s334 + $0x120] sm:$0xff] %v1139
        %1196 = vst [vmem:[%s334 + $0x128] sm:$0xff] %v1140
        %1197 = vst [vmem:[%s334 + $0x130] sm:$0xff] %v1141
        %1198 = vst [vmem:[%s334 + $0x138] sm:$0xff] %v1142
        %1199 = vst [vmem:[%s334 + $0x140] sm:$0xff] %v1143
        %1200 = vst [vmem:[%s334 + $0x148] sm:$0xff] %v1144
        %1201 = vst [vmem:[%s334 + $0x150] sm:$0xff] %v1145
        %1202 = vst [vmem:[%s334 + $0x158] sm:$0xff] %v1146
        %1203 = vst [vmem:[%s334 + $0x160] sm:$0xff] %v1147
        %1204 = vst [vmem:[%s334 + $0x168] sm:$0xff] %v1148
        %1205 = vst [vmem:[%s334 + $0x170] sm:$0xff] %v1149
        %1206 = vst [vmem:[%s334 + $0x178] sm:$0xff] %v1150
        %1207 = vst [vmem:[%s334 + $0x180] sm:$0x1] %v1151
        %1208 = vst [vmem:[%s334 + $0x188] sm:$0x1] %v1152
        %1209 = vst [vmem:[%s334 + $0x190] sm:$0x1] %v1153
        %1210 = vst [vmem:[%s334 + $0x198] sm:$0x1] %v1154
        %1211 = vst [vmem:[%s334 + $0x1a0] sm:$0x1] %v1155
        %1212 = vst [vmem:[%s334 + $0x1a8] sm:$0x1] %v1156
        %1213 = vst [vmem:[%s334 + $0x1b0] sm:$0x1] %v1157
        %1214 = vst [vmem:[%s334 + $0x1b8] sm:$0x1] %v1158
        %s1215 = sand.u32 %s139, 1
        %s1216 = scalar_lea.sflag [#allocation4], %s1215
        %s1217 = sand.u32 %s139, 1
        %s1218 = smul.addr %s1217, 448
        %s1219 = scalar_lea.vmem [#allocation10], %s1218
        // Predicated region
        $region53: #{tpu_custom_call.1} parent=35 // pred_check
          %p1220 = pneg %p149
        $region54: #{tpu_custom_call.1} parent=35 // pred_check_branch
          %1222 = sbr.rel (%p1220) target = $region56
        $region55: #{tpu_custom_call.1} parent=35 // pred_region
          %s1223 = smul.u32 8, %s27
          %1225 = vsyncadd %s1216, 0
          %s1226 = smul.addr %s1223, 8
          %s1227 = scalar_lea.hbm %s4, %s1226
          %s1228 = sshll.u32 %s1219, 4
          %s1229 = int_to_ptr.vmem [resolvable:$true] %s1228
          %s1230 = sshll.u32 %s1227, 4
          %s1231 = int_to_ptr.hbm [resolvable:$true] %s1230
          %1236 = dma.vmem_to_hbm [thread:$0]  %s1229, 7168, %s1231, %s1216, 1024, 2048, 64
        $region56: #{tpu_custom_call.1} parent=35 // pred_fallthru
          _
      $region36: #{tpu_custom_call.1} parent=5 // pred_fallthru
        _
      %p1237 = scmp.le.s32.totalorder 2, %s22
      // Predicated region
      $region57: #{tpu_custom_call.1} parent=5 // pred_check
        %p1238 = pneg %p1237
      $region58: #{tpu_custom_call.1} parent=5 // pred_check_branch
        %1240 = sbr.rel (%p1238) target = $region60
      $region59: #{tpu_custom_call.1} parent=5 // pred_region
        %s1241 = ssub.s32 %s22, 2
        // Predicated region
        $region61: #{tpu_custom_call.1} parent=59 // pred_check
          %p1242 = pneg %p155
        $region62: #{tpu_custom_call.1} parent=59 // pred_check_branch
          %1244 = sbr.rel (%p1242) target = $region64
        $region63: #{tpu_custom_call.1} parent=59 // pred_region
          %s1245 = sand.u32 %s140, 1
          %s1246 = scalar_lea.sflag [#allocation4], %s1245
          %s1247 = sand.u32 %s140, 1
          %s1248 = smul.addr %s1247, 448
          %s1249 = scalar_lea.vmem [#allocation10], %s1248
          %1251 = dma.done %s1246, 7168
        $region64: #{tpu_custom_call.1} parent=59 // pred_fallthru
          _
      $region60: #{tpu_custom_call.1} parent=5 // pred_fallthru
        _
    $region6: #{tpu_custom_call.1} parent=1 // loop_footer
      %s26 = sadd.s32 1, %s22
    $region7: #{tpu_custom_call.1} parent=1 // loop_footer_branch
      %21 = sbr.rel target = $region3
    $region8: #{tpu_custom_call.1} parent=1 // loop_exit
      _
    %1252 = vsyncpa [#allocation3], 1
    %s1253 = scalar_lea.sflag [#allocation3], 1
    %1254 = vsyncpa %s1253, 1
    %1255 = vsyncpa [#allocation6], 1
    %s1256 = scalar_lea.sflag [#allocation6], 1
    %1257 = vsyncpa %s1256, 1
    %1258 = vsyncpa [#allocation9], 1
    %s1259 = scalar_lea.sflag [#allocation9], 1
    %1260 = vsyncpa %s1259, 1
    %1261 = vsyncpa [#allocation4], 1
    %s1262 = scalar_lea.sflag [#allocation4], 1
    %1263 = vsyncpa %s1262, 1

</llo_original>
